<compile_context>
chip_gen: v6e
topology: v6e:2x2x1
jax: 0.10.0
libtpu: 0.0.40
codegen_flags: <defaults>
</compile_context>

<pallas_src>
import functools

import jax
import jax.numpy as jnp
from jax import lax
from jax.experimental import pallas as pl
from jax.experimental.pallas import tpu as pltpu


def _round_up(x: int, m: int) -> int:
    return (x + m - 1) // m * m


def _lid_prompt_concat_kernel(x_ref, w_lid_ref, b_lid_ref,
                              w_cx_ref, w_cl_ref, b_c_ref,
                              gamma_ref, beta_ref, o_ref,
                              *, d_real: int, eps: float):
    x = x_ref[...]                                       # (tm, D_pad), native dtype

    # frame_lid.ctc_lid: Linear(D -> L), f32 accumulation on the MXU.
    logits = jnp.dot(x, w_lid_ref[...], preferred_element_type=jnp.float32)
    logits = logits + b_lid_ref[...].astype(jnp.float32)  # (tm, L_pad)

    # swish / SiLU (sigmoid -> EUP exp slot).  Padded L columns stay exactly 0.
    logits = logits * jax.nn.sigmoid(logits)

    # concat_linear([xs, logits]) == xs @ W[:D] + logits @ W[D:]  (+ bias)
    y = jnp.dot(x, w_cx_ref[...], preferred_element_type=jnp.float32)
    y = y + jnp.dot(logits.astype(w_cl_ref.dtype), w_cl_ref[...],
                    preferred_element_type=jnp.float32)
    y = y + b_c_ref[...].astype(jnp.float32)             # (tm, D_pad)

    # LayerNorm over the real D columns.  Padded columns of y are exactly 0
    # (padded weights/bias are 0), so sum(y) over D_pad == sum over real D.
    inv_d = jnp.float32(1.0 / d_real)
    mean = jnp.sum(y, axis=-1, keepdims=True) * inv_d
    yc = y - mean
    if d_real != y.shape[-1]:
        col = lax.broadcasted_iota(jnp.int32, y.shape, 1)
        yc = jnp.where(col < d_real, yc, 0.0)            # zero padded cols for var
    var = jnp.sum(yc * yc, axis=-1, keepdims=True) * inv_d
    yn = yc * lax.rsqrt(var + eps)                       # rsqrt -> EUP
    o_ref[...] = (yn * gamma_ref[...].astype(jnp.float32)
                  + beta_ref[...].astype(jnp.float32)).astype(o_ref.dtype)


@functools.partial(jax.jit, static_argnames=("tm",))
def lid_prompt_concat(xs, w_lid, b_lid, w_cat, b_cat, gamma, beta, *, tm=256):
    """xs: (B, T, D); w_lid: (D, L); w_cat: (D+L, D) (weights pre-transposed to (in, out))."""
    B, T, D = xs.shape
    L = w_lid.shape[1]
    M = B * T

    # Lane-dense padding (multiples of 128 on the last axis).
    D_pad = _round_up(D, 128)
    L_pad = _round_up(L, 128)

    # Row tile: default 256, clamped for tiny problems; multiple of 16 so both
    # f32 (8) and bf16 (16) sublane packing constraints are satisfied.
    tm_eff = _round_up(min(tm, _round_up(M, 16)), 16)
    M_pad = _round_up(M, tm_eff)

    x2d = jnp.pad(xs.reshape(M, D), ((0, M_pad - M), (0, D_pad - D)))
    w_lid_p = jnp.pad(w_lid, ((0, D_pad - D), (0, L_pad - L)))
    b_lid_p = jnp.pad(b_lid, (0, L_pad - L)).reshape(1, L_pad)
    w_cx_p = jnp.pad(w_cat[:D, :], ((0, D_pad - D), (0, D_pad - D)))
    w_cl_p = jnp.pad(w_cat[D:, :], ((0, L_pad - L), (0, D_pad - D)))
    b_cat_p = jnp.pad(b_cat, (0, D_pad - D)).reshape(1, D_pad)
    gamma_p = jnp.pad(gamma, (0, D_pad - D)).reshape(1, D_pad)
    beta_p = jnp.pad(beta, (0, D_pad - D)).reshape(1, D_pad)

    # Advisory roofline for XLA's scheduler (real, unpadded dims).
    act_bytes = xs.dtype.itemsize
    par_bytes = w_cat.dtype.itemsize
    cost = pl.CostEstimate(
        flops=2 * M * (D * L + D * D + L * D),
        transcendentals=M * (L + 1),                 # sigmoid per logit + rsqrt per row
        bytes_accessed=2 * M * D * act_bytes
        + (D * L + L + (D + L) * D + D + 2 * D) * par_bytes,
    )

    kernel = functools.partial(_lid_prompt_concat_kernel, d_real=D, eps=1e-5)
    full = lambda i: (0, 0)

    out = pl.pallas_call(
        kernel,
        out_shape=jax.ShapeDtypeStruct((M_pad, D_pad), xs.dtype),
        grid_spec=pltpu.PrefetchScalarGridSpec(
            num_scalar_prefetch=0,
            grid=(M_pad // tm_eff,),
            in_specs=[
                pl.BlockSpec((tm_eff, D_pad), lambda i: (i, 0)),  # x tile
                pl.BlockSpec((D_pad, L_pad), full),               # ctc_lid weight
                pl.BlockSpec((1, L_pad), full),                   # ctc_lid bias
                pl.BlockSpec((D_pad, D_pad), full),               # concat_linear W (xs part)
                pl.BlockSpec((L_pad, D_pad), full),               # concat_linear W (logits part)
                pl.BlockSpec((1, D_pad), full),                   # concat_linear bias
                pl.BlockSpec((1, D_pad), full),                   # layer_norm gamma
                pl.BlockSpec((1, D_pad), full),                   # layer_norm beta
            ],
            out_specs=pl.BlockSpec((tm_eff, D_pad), lambda i: (i, 0)),
        ),
        compiler_params=pltpu.CompilerParams(
            dimension_semantics=("parallel",)),
        cost_estimate=cost,
    )(x2d, w_lid_p, b_lid_p, w_cx_p, w_cl_p, b_cat_p, gamma_p, beta_p)

    return out[:M, :D].reshape(B, T, D)


def _reference(xs, w_lid, b_lid, w_cat, b_cat, gamma, beta):
    logits = xs @ w_lid + b_lid
    logits = logits * jax.nn.sigmoid(logits)
    cat = jnp.concatenate([xs, logits], axis=-1)
    y = cat @ w_cat + b_cat
    mean = jnp.mean(y, axis=-1, keepdims=True)
    var = jnp.mean((y - mean) ** 2, axis=-1, keepdims=True)
    y = (y - mean) / jnp.sqrt(var + 1e-5)
    return y * gamma + beta


if __name__ == "__main__":
    B, T, D, L = 2, 8, 32, 8   # batch, seq, encoder_output_size, lid_class

    key = jax.random.PRNGKey(0)
    k = jax.random.split(key, 6)

    xs = jax.random.normal(k[0], (B, T, D), dtype=jnp.float32)

    # Deterministic synthetic parameters (PyTorch stores Linear weight as (out, in);
    # here they are kept pre-transposed as (in, out) for row-major matmul).
    w_lid = jax.random.normal(k[1], (D, L), dtype=jnp.float32) * 0.1
    b_lid = jax.random.normal(k[2], (L,), dtype=jnp.float32) * 0.1
    w_cat = jax.random.normal(k[3], (D + L, D), dtype=jnp.float32) * 0.1
    b_cat = jax.random.normal(k[4], (D,), dtype=jnp.float32) * 0.1
    gamma = jnp.ones((D,), dtype=jnp.float32)
    beta = jnp.zeros((D,), dtype=jnp.float32)

    out = lid_prompt_concat(xs, w_lid, b_lid, w_cat, b_cat, gamma, beta)
    jax.block_until_ready(out)

    ref = _reference(xs, w_lid, b_lid, w_cat, b_cat, gamma, beta)
    assert out.shape == (B, T, D)
    assert jnp.allclose(out, ref, atol=1e-4, rtol=1e-4), "mismatch vs reference"

    print("KERNEL_OK")
</pallas_src>

<mosaic_0001>
module attributes {stable_mosaic.version = 11 : i64} {
  func.func @_lid_prompt_concat_kernel(%arg0: i32, %arg1: memref<16x128xf32, #tpu.memory_space<vmem>>, %arg2: memref<128x128xf32, #tpu.memory_space<vmem>>, %arg3: memref<1x128xf32, #tpu.memory_space<vmem>>, %arg4: memref<128x128xf32, #tpu.memory_space<vmem>>, %arg5: memref<128x128xf32, #tpu.memory_space<vmem>>, %arg6: memref<1x128xf32, #tpu.memory_space<vmem>>, %arg7: memref<1x128xf32, #tpu.memory_space<vmem>>, %arg8: memref<1x128xf32, #tpu.memory_space<vmem>>, %arg9: memref<16x128xf32, #tpu.memory_space<vmem>>) attributes {dimension_semantics = [#tpu.dimension_semantics<parallel>], iteration_bounds = array<i64: 1>, scalar_prefetch = 0 : i64, scratch_operands = 0 : i64, tpu.core_type = #tpu.core_type<tc>, window_params = [{transform_indices = @transform_0, window_bounds = array<i64: 16, 128>}, {pipeline_mode = #tpu.pipeline_mode<synchronous>, transform_indices = @transform_1, window_bounds = array<i64: 128, 128>}, {pipeline_mode = #tpu.pipeline_mode<synchronous>, transform_indices = @transform_2, window_bounds = array<i64: 1, 128>}, {pipeline_mode = #tpu.pipeline_mode<synchronous>, transform_indices = @transform_3, window_bounds = array<i64: 128, 128>}, {pipeline_mode = #tpu.pipeline_mode<synchronous>, transform_indices = @transform_4, window_bounds = array<i64: 128, 128>}, {pipeline_mode = #tpu.pipeline_mode<synchronous>, transform_indices = @transform_5, window_bounds = array<i64: 1, 128>}, {pipeline_mode = #tpu.pipeline_mode<synchronous>, transform_indices = @transform_6, window_bounds = array<i64: 1, 128>}, {pipeline_mode = #tpu.pipeline_mode<synchronous>, transform_indices = @transform_7, window_bounds = array<i64: 1, 128>}, {transform_indices = @transform_8, window_bounds = array<i64: 16, 128>}]} {
    %c0 = arith.constant 0 : index
    %c0_0 = arith.constant 0 : index
    %0 = vector.load %arg1[%c0, %c0_0] : memref<16x128xf32, #tpu.memory_space<vmem>>, vector<16x128xf32>
    %c0_1 = arith.constant 0 : index
    %c0_2 = arith.constant 0 : index
    %1 = vector.load %arg2[%c0_1, %c0_2] : memref<128x128xf32, #tpu.memory_space<vmem>>, vector<128x128xf32>
    %cst = arith.constant dense<0.000000e+00> : vector<16x128xf32>
    %2 = tpu.matmul %0, %1, %cst {dimension_numbers = #tpu.dot_dimension_numbers<[1], [0], [0], [1], [0, 0, 1, 1], [], []>} : vector<16x128xf32>, vector<128x128xf32>, vector<16x128xf32> -> vector<16x128xf32>
    %c0_3 = arith.constant 0 : index
    %c0_4 = arith.constant 0 : index
    %3 = vector.load %arg3[%c0_3, %c0_4] : memref<1x128xf32, #tpu.memory_space<vmem>>, vector<1x128xf32>
    %4 = vector.broadcast %3 : vector<1x128xf32> to vector<16x128xf32>
    %5 = arith.addf %2, %4 : vector<16x128xf32>
    %6 = arith.negf %5 : vector<16x128xf32>
    %7 = math.exp %6 : vector<16x128xf32>
    %cst_5 = arith.constant 1.000000e+00 : f32
    %8 = vector.broadcast %cst_5 : f32 to vector<16x128xf32>
    %9 = arith.addf %8, %7 : vector<16x128xf32>
    %10 = arith.divf %8, %9 : vector<16x128xf32>
    %11 = arith.mulf %5, %10 : vector<16x128xf32>
    %c0_6 = arith.constant 0 : index
    %c0_7 = arith.constant 0 : index
    %12 = vector.load %arg4[%c0_6, %c0_7] : memref<128x128xf32, #tpu.memory_space<vmem>>, vector<128x128xf32>
    %cst_8 = arith.constant dense<0.000000e+00> : vector<16x128xf32>
    %13 = tpu.matmul %0, %12, %cst_8 {dimension_numbers = #tpu.dot_dimension_numbers<[1], [0], [0], [1], [0, 0, 1, 1], [], []>} : vector<16x128xf32>, vector<128x128xf32>, vector<16x128xf32> -> vector<16x128xf32>
    %c0_9 = arith.constant 0 : index
    %c0_10 = arith.constant 0 : index
    %14 = vector.load %arg5[%c0_9, %c0_10] : memref<128x128xf32, #tpu.memory_space<vmem>>, vector<128x128xf32>
    %cst_11 = arith.constant dense<0.000000e+00> : vector<16x128xf32>
    %15 = tpu.matmul %11, %14, %cst_11 {dimension_numbers = #tpu.dot_dimension_numbers<[1], [0], [0], [1], [0, 0, 1, 1], [], []>} : vector<16x128xf32>, vector<128x128xf32>, vector<16x128xf32> -> vector<16x128xf32>
    %16 = arith.addf %13, %15 : vector<16x128xf32>
    %c0_12 = arith.constant 0 : index
    %c0_13 = arith.constant 0 : index
    %17 = vector.load %arg6[%c0_12, %c0_13] : memref<1x128xf32, #tpu.memory_space<vmem>>, vector<1x128xf32>
    %18 = vector.broadcast %17 : vector<1x128xf32> to vector<16x128xf32>
    %19 = arith.addf %16, %18 : vector<16x128xf32>
    %cst_14 = arith.constant dense<0.000000e+00> : vector<16xf32>
    %20 = vector.multi_reduction <add>, %19, %cst_14 [1] : vector<16x128xf32> to vector<16xf32>
    %21 = vector.shape_cast %20 : vector<16xf32> to vector<16x1xf32>
    %cst_15 = arith.constant 3.125000e-02 : f32
    %22 = vector.broadcast %cst_15 : f32 to vector<16x1xf32>
    %23 = arith.mulf %21, %22 : vector<16x1xf32>
    %24 = vector.broadcast %23 : vector<16x1xf32> to vector<16x128xf32>
    %25 = arith.subf %19, %24 : vector<16x128xf32>
    %26 = tpu.iota {dimensions = array<i32: 1>} : vector<16x128xi32>
    %c32_i32 = arith.constant 32 : i32
    %27 = vector.broadcast %c32_i32 : i32 to vector<16x128xi32>
    %28 = arith.cmpi slt, %26, %27 : vector<16x128xi32>
    %cst_16 = arith.constant 0.000000e+00 : f32
    %29 = vector.broadcast %cst_16 : f32 to vector<16x128xf32>
    %30 = arith.select %28, %25, %29 : vector<16x128xi1>, vector<16x128xf32>
    %31 = arith.mulf %30, %30 : vector<16x128xf32>
    %cst_17 = arith.constant dense<0.000000e+00> : vector<16xf32>
    %32 = vector.multi_reduction <add>, %31, %cst_17 [1] : vector<16x128xf32> to vector<16xf32>
    %33 = vector.shape_cast %32 : vector<16xf32> to vector<16x1xf32>
    %cst_18 = arith.constant 3.125000e-02 : f32
    %34 = vector.broadcast %cst_18 : f32 to vector<16x1xf32>
    %35 = arith.mulf %33, %34 : vector<16x1xf32>
    %cst_19 = arith.constant 9.99999974E-6 : f32
    %36 = vector.broadcast %cst_19 : f32 to vector<16x1xf32>
    %37 = arith.addf %35, %36 : vector<16x1xf32>
    %38 = math.rsqrt %37 : vector<16x1xf32>
    %39 = vector.broadcast %38 : vector<16x1xf32> to vector<16x128xf32>
    %40 = arith.mulf %30, %39 : vector<16x128xf32>
    %c0_20 = arith.constant 0 : index
    %c0_21 = arith.constant 0 : index
    %41 = vector.load %arg7[%c0_20, %c0_21] : memref<1x128xf32, #tpu.memory_space<vmem>>, vector<1x128xf32>
    %42 = vector.broadcast %41 : vector<1x128xf32> to vector<16x128xf32>
    %43 = arith.mulf %40, %42 : vector<16x128xf32>
    %c0_22 = arith.constant 0 : index
    %c0_23 = arith.constant 0 : index
    %44 = vector.load %arg8[%c0_22, %c0_23] : memref<1x128xf32, #tpu.memory_space<vmem>>, vector<1x128xf32>
    %45 = vector.broadcast %44 : vector<1x128xf32> to vector<16x128xf32>
    %46 = arith.addf %43, %45 : vector<16x128xf32>
    %c0_24 = arith.constant 0 : index
    %c0_25 = arith.constant 0 : index
    %47 = vector.load %arg9[%c0_24, %c0_25] : memref<16x128xf32, #tpu.memory_space<vmem>>, vector<16x128xf32>
    tpu.vector_store %arg9[%c0_24, %c0_25], %46 {strides = array<i32>} : memref<16x128xf32, #tpu.memory_space<vmem>>, vector<16x128xf32>,
    return
  }
  func.func @transform_0(%arg0: i32) -> (i32, i32) {
    %c0_i32 = arith.constant 0 : i32
    %c0_i32_0 = arith.constant 0 : i32
    return %arg0, %c0_i32 : i32, i32
  }
  func.func @transform_1(%arg0: i32) -> (i32, i32) {
    %c0_i32 = arith.constant 0 : i32
    %c0_i32_0 = arith.constant 0 : i32
    %c0_i32_1 = arith.constant 0 : i32
    return %c0_i32, %c0_i32_0 : i32, i32
  }
  func.func @transform_2(%arg0: i32) -> (i32, i32) {
    %c0_i32 = arith.constant 0 : i32
    %c0_i32_0 = arith.constant 0 : i32
    %c0_i32_1 = arith.constant 0 : i32
    return %c0_i32, %c0_i32_0 : i32, i32
  }
  func.func @transform_3(%arg0: i32) -> (i32, i32) {
    %c0_i32 = arith.constant 0 : i32
    %c0_i32_0 = arith.constant 0 : i32
    %c0_i32_1 = arith.constant 0 : i32
    return %c0_i32, %c0_i32_0 : i32, i32
  }
  func.func @transform_4(%arg0: i32) -> (i32, i32) {
    %c0_i32 = arith.constant 0 : i32
    %c0_i32_0 = arith.constant 0 : i32
    %c0_i32_1 = arith.constant 0 : i32
    return %c0_i32, %c0_i32_0 : i32, i32
  }
  func.func @transform_5(%arg0: i32) -> (i32, i32) {
    %c0_i32 = arith.constant 0 : i32
    %c0_i32_0 = arith.constant 0 : i32
    %c0_i32_1 = arith.constant 0 : i32
    return %c0_i32, %c0_i32_0 : i32, i32
  }
  func.func @transform_6(%arg0: i32) -> (i32, i32) {
    %c0_i32 = arith.constant 0 : i32
    %c0_i32_0 = arith.constant 0 : i32
    %c0_i32_1 = arith.constant 0 : i32
    return %c0_i32, %c0_i32_0 : i32, i32
  }
  func.func @transform_7(%arg0: i32) -> (i32, i32) {
    %c0_i32 = arith.constant 0 : i32
    %c0_i32_0 = arith.constant 0 : i32
    %c0_i32_1 = arith.constant 0 : i32
    return %c0_i32, %c0_i32_0 : i32, i32
  }
  func.func @transform_8(%arg0: i32) -> (i32, i32) {
    %c0_i32 = arith.constant 0 : i32
    %c0_i32_0 = arith.constant 0 : i32
    return %arg0, %c0_i32 : i32, i32
  }
}

</mosaic_0001>

<llo_original>
// kernel: lid_prompt_concat.1
$region0: #{lid_prompt_concat.1}
  #allocation0 [shape = 'u32[]', space=smem, size = 0x4, offset = 0x4, fixed_abs, tag = 'smem constant byte address 0x4 - core index']
  #allocation1 [shape = 'u32[144,128]{1,0:T(1,128)}', space=vmem, size = 0x12000, scoped, tag = 'internal scratch']
  %s0 = inlined_call_operand.vmem [shape: f32[16,128], index: 0, kind: input, shape index: {}]
  %s1 = inlined_call_operand.vmem [shape: f32[128,128], index: 1, kind: input, shape index: {}]
  %s2 = inlined_call_operand.vmem [shape: f32[1,128], index: 2, kind: input, shape index: {}]
  %s3 = inlined_call_operand.vmem [shape: f32[128,128], index: 3, kind: input, shape index: {}]
  %s4 = inlined_call_operand.vmem [shape: f32[128,128], index: 4, kind: input, shape index: {}]
  %s5 = inlined_call_operand.vmem [shape: f32[1,128], index: 5, kind: input, shape index: {}]
  %s6 = inlined_call_operand.vmem [shape: f32[1,128], index: 6, kind: input, shape index: {}]
  %s7 = inlined_call_operand.vmem [shape: f32[1,128], index: 7, kind: input, shape index: {}]
  %s8 = inlined_call_operand.vmem [shape: f32[16,128], index: 8, kind: output, shape index: {}]
  %s9 = sld [smem:[#allocation0]]
  $region42: #{lid_prompt_concat.1} parent=0
    _
  %s11 = ssub.s32 1, %s9
  %s12 = scalar_select 0, %s11, %s9
  // Predicated region
  $region2: #{lid_prompt_concat.1} parent=0 // pred_check
    _
  $region3: #{lid_prompt_concat.1} parent=0 // pred_check_branch
    %14 = sbr.rel (0) target = $region5
  $region4: #{lid_prompt_concat.1} parent=0 // pred_region
    _
  $region5: #{lid_prompt_concat.1} parent=0 // pred_fallthru
    _
  // Predicated region
  $region6: #{lid_prompt_concat.1} parent=0 // pred_check
    _
  $region7: #{lid_prompt_concat.1} parent=0 // pred_check_branch
    %16 = sbr.rel (0) target = $region9
  $region8: #{lid_prompt_concat.1} parent=0 // pred_region
    _
  $region9: #{lid_prompt_concat.1} parent=0 // pred_fallthru
    _
  // Predicated region
  $region10: #{lid_prompt_concat.1} parent=0 // pred_check
    _
  $region11: #{lid_prompt_concat.1} parent=0 // pred_check_branch
    %18 = sbr.rel (0) target = $region13
  $region12: #{lid_prompt_concat.1} parent=0 // pred_region
    _
  $region13: #{lid_prompt_concat.1} parent=0 // pred_fallthru
    _
  // Predicated region
  $region14: #{lid_prompt_concat.1} parent=0 // pred_check
    _
  $region15: #{lid_prompt_concat.1} parent=0 // pred_check_branch
    %20 = sbr.rel (0) target = $region17
  $region16: #{lid_prompt_concat.1} parent=0 // pred_region
    _
  $region17: #{lid_prompt_concat.1} parent=0 // pred_fallthru
    _
  // Predicated region
  $region18: #{lid_prompt_concat.1} parent=0 // pred_check
    _
  $region19: #{lid_prompt_concat.1} parent=0 // pred_check_branch
    %22 = sbr.rel (0) target = $region21
  $region20: #{lid_prompt_concat.1} parent=0 // pred_region
    _
  $region21: #{lid_prompt_concat.1} parent=0 // pred_fallthru
    _
  // Predicated region
  $region22: #{lid_prompt_concat.1} parent=0 // pred_check
    _
  $region23: #{lid_prompt_concat.1} parent=0 // pred_check_branch
    %24 = sbr.rel (0) target = $region25
  $region24: #{lid_prompt_concat.1} parent=0 // pred_region
    _
  $region25: #{lid_prompt_concat.1} parent=0 // pred_fallthru
    _
  // Predicated region
  $region26: #{lid_prompt_concat.1} parent=0 // pred_check
    _
  $region27: #{lid_prompt_concat.1} parent=0 // pred_check_branch
    %26 = sbr.rel (0) target = $region29
  $region28: #{lid_prompt_concat.1} parent=0 // pred_region
    _
  $region29: #{lid_prompt_concat.1} parent=0 // pred_fallthru
    _
  // Predicated region
  $region30: #{lid_prompt_concat.1} parent=0 // pred_check
    _
  $region31: #{lid_prompt_concat.1} parent=0 // pred_check_branch
    %28 = sbr.rel (0) target = $region33
  $region32: #{lid_prompt_concat.1} parent=0 // pred_region
    _
  $region33: #{lid_prompt_concat.1} parent=0 // pred_fallthru
    _
  %v29 = vld [vmem:[%s0] sm:$0xff]
  %v30 = vld [vmem:[%s0 + $0x8] sm:$0xff]
  %v31 = vld [vmem:[%s1] sm:$0xff]
  %v32 = vld [vmem:[%s1 + $0x8] sm:$0xff]
  %v33 = vld [vmem:[%s1 + $0x10] sm:$0xff]
  %v34 = vld [vmem:[%s1 + $0x18] sm:$0xff]
  %v35 = vld [vmem:[%s1 + $0x20] sm:$0xff]
  %v36 = vld [vmem:[%s1 + $0x28] sm:$0xff]
  %v37 = vld [vmem:[%s1 + $0x30] sm:$0xff]
  %v38 = vld [vmem:[%s1 + $0x38] sm:$0xff]
  %v39 = vld [vmem:[%s1 + $0x40] sm:$0xff]
  %v40 = vld [vmem:[%s1 + $0x48] sm:$0xff]
  %v41 = vld [vmem:[%s1 + $0x50] sm:$0xff]
  %v42 = vld [vmem:[%s1 + $0x58] sm:$0xff]
  %v43 = vld [vmem:[%s1 + $0x60] sm:$0xff]
  %v44 = vld [vmem:[%s1 + $0x68] sm:$0xff]
  %v45 = vld [vmem:[%s1 + $0x70] sm:$0xff]
  %v46 = vld [vmem:[%s1 + $0x78] sm:$0xff]
  %v47 = vld [vmem:[%s2] sm:$0x1]
  %v49 = vlaneseq
  %v50 = vshrl.u32 %v49, 7
  %v51 = vsub.s32 0, %v50
  %v52 = vrot.slane %v47, %v51
  %54 = vmatprep.subr.mxu0 0.0
  %55 = vmatpush1.msra.mxu0 %v46
  %56 = vmatprep.subr.mxu0 0.0
  %57 = vmatpush1.msra.mxu0 %v45
  %58 = vmatprep.subr.mxu0 0.0
  %59 = vmatpush1.msra.mxu0 %v44
  %60 = vmatprep.subr.mxu0 0.0
  %61 = vmatpush1.msra.mxu0 %v43
  %62 = vmatprep.subr.mxu0 0.0
  %63 = vmatpush1.msra.mxu0 %v42
  %64 = vmatprep.subr.mxu0 0.0
  %65 = vmatpush1.msra.mxu0 %v41
  %66 = vmatprep.subr.mxu0 0.0
  %67 = vmatpush1.msra.mxu0 %v40
  %68 = vmatprep.subr.mxu0 0.0
  %69 = vmatpush1.msra.mxu0 %v39
  %70 = vmatprep.subr.mxu0 0.0
  %71 = vmatpush1.msra.mxu0 %v38
  %72 = vmatprep.subr.mxu0 0.0
  %73 = vmatpush1.msra.mxu0 %v37
  %74 = vmatprep.subr.mxu0 0.0
  %75 = vmatpush1.msra.mxu0 %v36
  %76 = vmatprep.subr.mxu0 0.0
  %77 = vmatpush1.msra.mxu0 %v35
  %78 = vmatprep.subr.mxu0 0.0
  %79 = vmatpush1.msra.mxu0 %v34
  %80 = vmatprep.subr.mxu0 0.0
  %81 = vmatpush1.msra.mxu0 %v33
  %82 = vmatprep.subr.mxu0 0.0
  %83 = vmatpush1.msra.mxu0 %v32
  %84 = vmatprep.subr.mxu0 0.0
  %85 = vmatpush1.msra.mxu0 %v31
  %86 = vmatprep.subr.mxu0 0.0
  %87 = vmatpush2.msra.mxu0 0.0
  %88 = vmatprep.subr.mxu0 0.0
  %89 = vmatpush2.msra.mxu0 0.0
  %90 = vmatprep.subr.mxu0 0.0
  %91 = vmatpush2.msra.mxu0 0.0
  %92 = vmatprep.subr.mxu0 0.0
  %93 = vmatpush2.msra.mxu0 0.0
  %94 = vmatprep.subr.mxu0 0.0
  %95 = vmatpush2.msra.mxu0 0.0
  %96 = vmatprep.subr.mxu0 0.0
  %97 = vmatpush2.msra.mxu0 0.0
  %98 = vmatprep.subr.mxu0 0.0
  %99 = vmatpush2.msra.mxu0 0.0
  %100 = vmatprep.subr.mxu0 0.0
  %101 = vmatpush2.msra.mxu0 0.0
  %102 = vmatprep.subr.mxu0 0.0
  %103 = vmatpush2.msra.mxu0 0.0
  %104 = vmatprep.subr.mxu0 0.0
  %105 = vmatpush2.msra.mxu0 0.0
  %106 = vmatprep.subr.mxu0 0.0
  %107 = vmatpush2.msra.mxu0 0.0
  %108 = vmatprep.subr.mxu0 0.0
  %109 = vmatpush2.msra.mxu0 0.0
  %110 = vmatprep.subr.mxu0 0.0
  %111 = vmatpush2.msra.mxu0 0.0
  %112 = vmatprep.subr.mxu0 0.0
  %113 = vmatpush2.msra.mxu0 0.0
  %114 = vmatprep.subr.mxu0 0.0
  %115 = vmatpush2.msra.mxu0 0.0
  %116 = vmatprep.subr.mxu0 0.0
  %117 = vmatpush2.msra.mxu0 0.0
  %118 = vmatprep.mubr.f32.mxu0 0.0
  %119 = vmatmul.mubr.f32.gmra.mxu0 %v29
  %v120 = vpop.f32.mrf.mxu0
  %v121 = vadd.f32 %v52, %v120
  %v122 = vpop.f32.mrf.mxu0
  %123 = vmatprep.mubr.f32.mxu0 0.0
  %124 = vmatmul.mubr.f32.gmra.mxu0 %v30
  %v125 = vpop.f32.mrf.mxu0
  %v126 = vadd.f32 %v52, %v125
  %v127 = vpop.f32.mrf.mxu0
  %128 = vdwg.mxu0
  %v129 = vxor.u32 %v121, 2147483648
  %v130 = vxor.u32 %v126, 2147483648
  %v131 = vmul.f32 %v129, 1.442695
  %v132 = vpow.pop %v131
  %v133 = vmul.f32 %v130, 1.442695
  %v134 = vpow.pop %v133
  %v135 = vadd.f32 %v132, 1.0
  %v136 = vadd.f32 %v134, 1.0
  %v137 = vrcp.pop %v135
  %v138 = vmul.f32 1.0, %v137
  %v139 = vrcp.pop %v136
  %v140 = vmul.f32 1.0, %v139
  %v141 = vmul.f32 %v121, %v138
  %v142 = vmul.f32 %v126, %v140
  %v143 = vld [vmem:[%s3] sm:$0xff]
  %v144 = vld [vmem:[%s3 + $0x8] sm:$0xff]
  %v145 = vld [vmem:[%s3 + $0x10] sm:$0xff]
  %v146 = vld [vmem:[%s3 + $0x18] sm:$0xff]
  %v147 = vld [vmem:[%s3 + $0x20] sm:$0xff]
  %v148 = vld [vmem:[%s3 + $0x28] sm:$0xff]
  %v149 = vld [vmem:[%s3 + $0x30] sm:$0xff]
  %v150 = vld [vmem:[%s3 + $0x38] sm:$0xff]
  %v151 = vld [vmem:[%s3 + $0x40] sm:$0xff]
  %v152 = vld [vmem:[%s3 + $0x48] sm:$0xff]
  %v153 = vld [vmem:[%s3 + $0x50] sm:$0xff]
  %v154 = vld [vmem:[%s3 + $0x58] sm:$0xff]
  %v155 = vld [vmem:[%s3 + $0x60] sm:$0xff]
  %v156 = vld [vmem:[%s3 + $0x68] sm:$0xff]
  %v157 = vld [vmem:[%s3 + $0x70] sm:$0xff]
  %v158 = vld [vmem:[%s3 + $0x78] sm:$0xff]
  %v159 = vld [vmem:[%s4] sm:$0xff]
  %v160 = vld [vmem:[%s4 + $0x8] sm:$0xff]
  %v161 = vld [vmem:[%s4 + $0x10] sm:$0xff]
  %v162 = vld [vmem:[%s4 + $0x18] sm:$0xff]
  %v163 = vld [vmem:[%s4 + $0x20] sm:$0xff]
  %v164 = vld [vmem:[%s4 + $0x28] sm:$0xff]
  %v165 = vld [vmem:[%s4 + $0x30] sm:$0xff]
  %v166 = vld [vmem:[%s4 + $0x38] sm:$0xff]
  %v167 = vld [vmem:[%s4 + $0x40] sm:$0xff]
  %v168 = vld [vmem:[%s4 + $0x48] sm:$0xff]
  %v169 = vld [vmem:[%s4 + $0x50] sm:$0xff]
  %v170 = vld [vmem:[%s4 + $0x58] sm:$0xff]
  %v171 = vld [vmem:[%s4 + $0x60] sm:$0xff]
  %v172 = vld [vmem:[%s4 + $0x68] sm:$0xff]
  %v173 = vld [vmem:[%s4 + $0x70] sm:$0xff]
  %v174 = vld [vmem:[%s4 + $0x78] sm:$0xff]
  %175 = vmatprep.subr.mxu0 0.0
  %176 = vmatpush1.msra.mxu0 %v174
  %177 = vmatprep.subr.mxu0 0.0
  %178 = vmatpush1.msra.mxu0 %v173
  %179 = vmatprep.subr.mxu0 0.0
  %180 = vmatpush1.msra.mxu0 %v172
  %181 = vmatprep.subr.mxu0 0.0
  %182 = vmatpush1.msra.mxu0 %v171
  %183 = vmatprep.subr.mxu0 0.0
  %184 = vmatpush1.msra.mxu0 %v170
  %185 = vmatprep.subr.mxu0 0.0
  %186 = vmatpush1.msra.mxu0 %v169
  %187 = vmatprep.subr.mxu0 0.0
  %188 = vmatpush1.msra.mxu0 %v168
  %189 = vmatprep.subr.mxu0 0.0
  %190 = vmatpush1.msra.mxu0 %v167
  %191 = vmatprep.subr.mxu0 0.0
  %192 = vmatpush1.msra.mxu0 %v166
  %193 = vmatprep.subr.mxu0 0.0
  %194 = vmatpush1.msra.mxu0 %v165
  %195 = vmatprep.subr.mxu0 0.0
  %196 = vmatpush1.msra.mxu0 %v164
  %197 = vmatprep.subr.mxu0 0.0
  %198 = vmatpush1.msra.mxu0 %v163
  %199 = vmatprep.subr.mxu0 0.0
  %200 = vmatpush1.msra.mxu0 %v162
  %201 = vmatprep.subr.mxu0 0.0
  %202 = vmatpush1.msra.mxu0 %v161
  %203 = vmatprep.subr.mxu0 0.0
  %204 = vmatpush1.msra.mxu0 %v160
  %205 = vmatprep.subr.mxu0 0.0
  %206 = vmatpush1.msra.mxu0 %v159
  %207 = vmatprep.subr.mxu0 0.0
  %208 = vmatpush2.msra.mxu0 0.0
  %209 = vmatprep.subr.mxu0 0.0
  %210 = vmatpush2.msra.mxu0 0.0
  %211 = vmatprep.subr.mxu0 0.0
  %212 = vmatpush2.msra.mxu0 0.0
  %213 = vmatprep.subr.mxu0 0.0
  %214 = vmatpush2.msra.mxu0 0.0
  %215 = vmatprep.subr.mxu0 0.0
  %216 = vmatpush2.msra.mxu0 0.0
  %217 = vmatprep.subr.mxu0 0.0
  %218 = vmatpush2.msra.mxu0 0.0
  %219 = vmatprep.subr.mxu0 0.0
  %220 = vmatpush2.msra.mxu0 0.0
  %221 = vmatprep.subr.mxu0 0.0
  %222 = vmatpush2.msra.mxu0 0.0
  %223 = vmatprep.subr.mxu0 0.0
  %224 = vmatpush2.msra.mxu0 0.0
  %225 = vmatprep.subr.mxu0 0.0
  %226 = vmatpush2.msra.mxu0 0.0
  %227 = vmatprep.subr.mxu0 0.0
  %228 = vmatpush2.msra.mxu0 0.0
  %229 = vmatprep.subr.mxu0 0.0
  %230 = vmatpush2.msra.mxu0 0.0
  %231 = vmatprep.subr.mxu0 0.0
  %232 = vmatpush2.msra.mxu0 0.0
  %233 = vmatprep.subr.mxu0 0.0
  %234 = vmatpush2.msra.mxu0 0.0
  %235 = vmatprep.subr.mxu0 0.0
  %236 = vmatpush2.msra.mxu0 0.0
  %237 = vmatprep.subr.mxu0 0.0
  %238 = vmatpush2.msra.mxu0 0.0
  %239 = vmatprep.mubr.f32.mxu0 0.0
  %240 = vmatmul.mubr.f32.gmra.mxu0 %v141
  %v241 = vpop.f32.mrf.mxu0
  %v242 = vadd.f32 0.0, %v241
  %v243 = vpop.f32.mrf.mxu0
  %244 = vmatprep.mubr.f32.mxu0 0.0
  %245 = vmatmul.mubr.f32.gmra.mxu0 %v142
  %v246 = vpop.f32.mrf.mxu0
  %v247 = vadd.f32 0.0, %v246
  %v248 = vpop.f32.mrf.mxu0
  %249 = vdwg.mxu0
  %250 = vmatprep.subr.mxu0 0.0
  %251 = vmatpush1.msra.mxu0 %v158
  %252 = vmatprep.subr.mxu0 0.0
  %253 = vmatpush1.msra.mxu0 %v157
  %254 = vmatprep.subr.mxu0 0.0
  %255 = vmatpush1.msra.mxu0 %v156
  %256 = vmatprep.subr.mxu0 0.0
  %257 = vmatpush1.msra.mxu0 %v155
  %258 = vmatprep.subr.mxu0 0.0
  %259 = vmatpush1.msra.mxu0 %v154
  %260 = vmatprep.subr.mxu0 0.0
  %261 = vmatpush1.msra.mxu0 %v153
  %262 = vmatprep.subr.mxu0 0.0
  %263 = vmatpush1.msra.mxu0 %v152
  %264 = vmatprep.subr.mxu0 0.0
  %265 = vmatpush1.msra.mxu0 %v151
  %266 = vmatprep.subr.mxu0 0.0
  %267 = vmatpush1.msra.mxu0 %v150
  %268 = vmatprep.subr.mxu0 0.0
  %269 = vmatpush1.msra.mxu0 %v149
  %270 = vmatprep.subr.mxu0 0.0
  %271 = vmatpush1.msra.mxu0 %v148
  %272 = vmatprep.subr.mxu0 0.0
  %273 = vmatpush1.msra.mxu0 %v147
  %274 = vmatprep.subr.mxu0 0.0
  %275 = vmatpush1.msra.mxu0 %v146
  %276 = vmatprep.subr.mxu0 0.0
  %277 = vmatpush1.msra.mxu0 %v145
  %278 = vmatprep.subr.mxu0 0.0
  %279 = vmatpush1.msra.mxu0 %v144
  %280 = vmatprep.subr.mxu0 0.0
  %281 = vmatpush1.msra.mxu0 %v143
  %282 = vmatprep.subr.mxu0 0.0
  %283 = vmatpush2.msra.mxu0 0.0
  %284 = vmatprep.subr.mxu0 0.0
  %285 = vmatpush2.msra.mxu0 0.0
  %286 = vmatprep.subr.mxu0 0.0
  %287 = vmatpush2.msra.mxu0 0.0
  %288 = vmatprep.subr.mxu0 0.0
  %289 = vmatpush2.msra.mxu0 0.0
  %290 = vmatprep.subr.mxu0 0.0
  %291 = vmatpush2.msra.mxu0 0.0
  %292 = vmatprep.subr.mxu0 0.0
  %293 = vmatpush2.msra.mxu0 0.0
  %294 = vmatprep.subr.mxu0 0.0
  %295 = vmatpush2.msra.mxu0 0.0
  %296 = vmatprep.subr.mxu0 0.0
  %297 = vmatpush2.msra.mxu0 0.0
  %298 = vmatprep.subr.mxu0 0.0
  %299 = vmatpush2.msra.mxu0 0.0
  %300 = vmatprep.subr.mxu0 0.0
  %301 = vmatpush2.msra.mxu0 0.0
  %302 = vmatprep.subr.mxu0 0.0
  %303 = vmatpush2.msra.mxu0 0.0
  %304 = vmatprep.subr.mxu0 0.0
  %305 = vmatpush2.msra.mxu0 0.0
  %306 = vmatprep.subr.mxu0 0.0
  %307 = vmatpush2.msra.mxu0 0.0
  %308 = vmatprep.subr.mxu0 0.0
  %309 = vmatpush2.msra.mxu0 0.0
  %310 = vmatprep.subr.mxu0 0.0
  %311 = vmatpush2.msra.mxu0 0.0
  %312 = vmatprep.subr.mxu0 0.0
  %313 = vmatpush2.msra.mxu0 0.0
  %314 = vmatprep.mubr.f32.mxu0 0.0
  %315 = vmatmul.mubr.f32.gmra.mxu0 %v29
  %v316 = vpop.f32.mrf.mxu0
  %v317 = vadd.f32 %v242, %v316
  %v318 = vpop.f32.mrf.mxu0
  %319 = vmatprep.mubr.f32.mxu0 0.0
  %320 = vmatmul.mubr.f32.gmra.mxu0 %v30
  %v321 = vpop.f32.mrf.mxu0
  %v322 = vadd.f32 %v247, %v321
  %v323 = vpop.f32.mrf.mxu0
  %324 = vdwg.mxu0
  %v325 = vld [vmem:[%s5] sm:$0x1]
  %v327 = vlaneseq
  %v328 = vshrl.u32 %v327, 7
  %v329 = vsub.s32 0, %v328
  %v330 = vrot.slane %v325, %v329
  %v332 = vadd.f32 %v317, %v330
  %v333 = vadd.f32 %v322, %v330
  %334 = vadd.xlane.f32.xlu0 %v332
  %v335 = vpop.xlane.xlu0 %334
  %336 = vadd.xlane.f32.xlu0 %v333
  %v337 = vpop.xlane.xlu0 %336
  %v338 = vmul.f32 %v335, 0.03125
  %v339 = vmul.f32 %v337, 0.03125
  %v340 = vsub.f32 %v332, %v338
  %v341 = vsub.f32 %v333, %v339
  %v342 = vlaneseq
  %v343 = vand.u32 %v342, 127
  %vm344 = vcmp.lt.s32.totalorder %v343, 32
  %v345 = vsel %vm344, %v340, 0.0
  %v346 = vsel %vm344, %v341, 0.0
  %v347 = vmul.f32 %v345, %v345
  %v348 = vmul.f32 %v346, %v346
  %349 = vadd.xlane.f32.xlu0 %v347
  %v350 = vpop.xlane.xlu0 %349
  %351 = vadd.xlane.f32.xlu0 %v348
  %v352 = vpop.xlane.xlu0 %351
  %v353 = vmul.f32 %v350, 0.03125
  %v354 = vmul.f32 %v352, 0.03125
  %v355 = vadd.f32 %v353, 1e-05
  %v356 = vadd.f32 %v354, 1e-05
  %v357 = vrsqrt.pop %v355
  %v358 = vrsqrt.pop %v356
  %v359 = vmul.f32 %v345, %v357
  %v360 = vmul.f32 %v346, %v358
  %v361 = vld [vmem:[%s6] sm:$0x1]
  %v363 = vlaneseq
  %v364 = vshrl.u32 %v363, 7
  %v365 = vsub.s32 0, %v364
  %v366 = vrot.slane %v361, %v365
  %v368 = vmul.f32 %v359, %v366
  %v369 = vmul.f32 %v360, %v366
  %v370 = vld [vmem:[%s7] sm:$0x1]
  %v372 = vlaneseq
  %v373 = vshrl.u32 %v372, 7
  %v374 = vsub.s32 0, %v373
  %v375 = vrot.slane %v370, %v374
  %v377 = vadd.f32 %v368, %v375
  %v378 = vadd.f32 %v369, %v375
  %379 = vst [vmem:[%s8] sm:$0xff] %v377
  %380 = vst [vmem:[%s8 + $0x8] sm:$0xff] %v378
  // Predicated region
  $region34: #{lid_prompt_concat.1} parent=0 // pred_check
    _
  $region35: #{lid_prompt_concat.1} parent=0 // pred_check_branch
    %382 = sbr.rel (0) target = $region37
  $region36: #{lid_prompt_concat.1} parent=0 // pred_region
    _
  $region37: #{lid_prompt_concat.1} parent=0 // pred_fallthru
    _
  // Predicated region
  $region38: #{lid_prompt_concat.1} parent=0 // pred_check
    _
  $region39: #{lid_prompt_concat.1} parent=0 // pred_check_branch
    %384 = sbr.rel (0) target = $region41
  $region40: #{lid_prompt_concat.1} parent=0 // pred_region
    _
  $region41: #{lid_prompt_concat.1} parent=0 // pred_fallthru
    _

</llo_original>
